<compile_context>
chip_gen: v7x
topology: tpu7x:2x2x1
jax: 0.10.0
libtpu: 0.0.40
codegen_flags: <defaults>
</compile_context>

<pallas_src>
import functools
import math

import jax
import jax.numpy as jnp
from jax.experimental import pallas as pl
from jax.experimental.pallas import tpu as pltpu

MIN_NORM = 1e-15
EPS_F32 = 4e-3  # PoincareBall.eps[torch.float32]


# ----------------------------- shared scalar helpers -------------------------

def _artanh(x):
    x = jnp.clip(x, -1.0 + 1e-15, 1.0 - 1e-15)
    return 0.5 * (jnp.log1p(x) - jnp.log1p(-x))


def _round_up(n, m):
    return ((n + m - 1) // m) * m


def _vmem_capacity_bytes():
    try:
        return int(pltpu.get_tpu_info().vmem_capacity_bytes)
    except Exception:
        return 64 * 1024 * 1024  # conservative (v7x per-core) fallback


# ----------------------------- pure-JAX reference (mirrors torch HGCN) -------

def _norm_last(x):
    return jnp.maximum(jnp.sqrt(jnp.sum(x * x, axis=-1, keepdims=True)), MIN_NORM)


def _proj(x, c):
    norm = _norm_last(x)
    maxnorm = (1.0 - EPS_F32) / jnp.sqrt(c)
    return jnp.where(norm > maxnorm, x / norm * maxnorm, x)


def _expmap0(u, c):
    sqrt_c = jnp.sqrt(c)
    u_norm = _norm_last(u)
    return jnp.tanh(sqrt_c * u_norm) * u / (sqrt_c * u_norm)


def _mobius_add(x, y, c):
    x2 = jnp.sum(x * x, axis=-1, keepdims=True)
    y2 = jnp.sum(y * y, axis=-1, keepdims=True)
    xy = jnp.sum(x * y, axis=-1, keepdims=True)
    num = (1.0 + 2.0 * c * xy + c * y2) * x + (1.0 - c * x2) * y
    denom = 1.0 + 2.0 * c * xy + (c ** 2) * x2 * y2
    return num / jnp.maximum(denom, MIN_NORM)


def _mobius_matvec(w, x, c):
    sqrt_c = jnp.sqrt(c)
    x_norm = _norm_last(x)
    mx = x @ w.T
    mx_norm = _norm_last(mx)
    res_c = jnp.tanh(mx_norm / x_norm * _artanh(sqrt_c * x_norm)) * mx / (mx_norm * sqrt_c)
    cond = jnp.all(mx == 0.0, axis=-1, keepdims=True)
    return jnp.where(cond, jnp.zeros_like(res_c), res_c)


def hyp_linear_ref(x, weight, bias, c, use_bias=True):
    c = jnp.float32(c)
    res = _proj(_mobius_matvec(weight, x, c), c)
    if use_bias:
        hyp_bias = _proj(_expmap0(bias, c), c)
        res = _proj(_mobius_add(res, hyp_bias, c), c)
    return res


# ----------------------------- Pallas kernel ---------------------------------

def _hyplinear_kernel(x_ref, w_ref, *rest, c, sqrt_c, use_bias):
    if use_bias:
        hb_ref, y2_ref, o_ref = rest
    else:
        (o_ref,) = rest

    maxnorm = (1.0 - EPS_F32) / sqrt_c   # Python float, folded at trace time

    x = x_ref[...]          # (TM, Fin_p)   f32
    w = w_ref[...]          # (Fin_p, Fout_p) f32, pre-transposed in the wrapper

    # ---- mobius_matvec -------------------------------------------------------
    x2 = jnp.sum(x * x, axis=-1, keepdims=True)                 # (TM, 1)
    x_norm = jnp.maximum(jnp.sqrt(x2), MIN_NORM)

    # Native [M,K]x[K,N] contraction; MXU consumes it directly, no relayout.
    mx = jnp.dot(x, w, preferred_element_type=jnp.float32)      # (TM, Fout_p)
    mx2 = jnp.sum(mx * mx, axis=-1, keepdims=True)              # (TM, 1)
    mx_norm = jnp.maximum(jnp.sqrt(mx2), MIN_NORM)

    inv_x_norm = pl.reciprocal(x_norm, approx=False)
    inv_mxc = pl.reciprocal(mx_norm * sqrt_c, approx=False)
    scale = jnp.tanh(mx_norm * inv_x_norm * _artanh(sqrt_c * x_norm)) * inv_mxc
    # all-zero-row guard (equiv. to all(mx == 0)); reuses mx2, no extra reduce
    scale = jnp.where(mx2 == 0.0, 0.0, scale)                   # (TM, 1), scale >= 0

    # ---- proj(res, c) folded into a per-row factor ---------------------------
    res_norm = scale * mx_norm                                  # analytic ||res||
    clip1 = jnp.where(res_norm > maxnorm,
                      maxnorm * pl.reciprocal(jnp.maximum(res_norm, MIN_NORM), approx=False),
                      1.0)
    scale_eff = scale * clip1                                   # (TM, 1)

    if not use_bias:
        o_ref[...] = (scale_eff * mx).astype(o_ref.dtype)       # single full-tile pass
        return

    hb = hb_ref[...]                                            # (1, Fout_p) precomputed hyp bias
    y2 = y2_ref[0]                                              # scalar: sum(hb*hb), hoisted

    # ---- mobius_add(res_p, hb) without materializing res_p -------------------
    x2b = (scale_eff * scale_eff) * mx2                         # ||res_p||^2  (TM, 1)
    mxhb = jnp.sum(mx * hb, axis=-1, keepdims=True)             # (TM, 1)
    xy = scale_eff * mxhb                                       # <res_p, hb>

    two_cxy = (2.0 * c) * xy
    denom = 1.0 + two_cxy + (c * c) * y2 * x2b
    inv_d = pl.reciprocal(jnp.maximum(denom, MIN_NORM), approx=False)

    a_row = (1.0 + two_cxy + c * y2) * scale_eff * inv_d        # (TM, 1) coeff of mx
    b_row = (1.0 - c * x2b) * inv_d                             # (TM, 1) coeff of hb
    madd = a_row * mx + b_row * hb                              # (TM, Fout_p)

    # ---- final proj as a per-row factor ---------------------------------------
    m2 = jnp.sum(madd * madd, axis=-1, keepdims=True)
    normf = jnp.maximum(jnp.sqrt(m2), MIN_NORM)
    clip2 = jnp.where(normf > maxnorm, maxnorm * pl.reciprocal(normf, approx=False), 1.0)
    o_ref[...] = (clip2 * madd).astype(o_ref.dtype)


def _build_pallas_call(n_pad, tm, fin_p, fout_p, c, sqrt_c, use_bias, vmem_limit,
                       single_buffer_resident):
    # Resident operands (constant index_map): single-buffered to halve their VMEM cost.
    resident_kw = dict(pipeline_mode=pl.Buffered(buffer_count=1)) if single_buffer_resident else {}

    in_specs = [
        pl.BlockSpec((tm, fin_p), lambda i: (i, 0)),                       # x: pipelined per row tile
        pl.BlockSpec((fin_p, fout_p), lambda i: (0, 0), **resident_kw),    # weight: resident
    ]
    if use_bias:
        in_specs.append(pl.BlockSpec((1, fout_p), lambda i: (0, 0), **resident_kw))  # hyp_bias
        in_specs.append(pl.BlockSpec(memory_space=pltpu.MemorySpace.SMEM))            # y2 scalar

    kernel = functools.partial(_hyplinear_kernel, c=c, sqrt_c=sqrt_c, use_bias=use_bias)
    return pl.pallas_call(
        kernel,
        out_shape=jax.ShapeDtypeStruct((n_pad, fout_p), jnp.float32),
        grid=(n_pad // tm,),
        in_specs=in_specs,
        out_specs=pl.BlockSpec((tm, fout_p), lambda i: (i, 0)),
        compiler_params=pltpu.CompilerParams(
            dimension_semantics=("parallel",),   # row axis: no carried state, megacore-shardable
            vmem_limit_bytes=vmem_limit,
        ),
    )


def hyp_linear(x, weight, bias, c, use_bias=True, block_rows=512):
    """x: [N, in], weight: [out, in], bias: [1, out] or [out] -> [N, out] float32."""
    N, Fin = x.shape
    Fout = weight.shape[0]
    c = float(c)
    sqrt_c = math.sqrt(c)

    # Lane-dense padding of feature dims (exact: zero rows/cols don't change any
    # row-wise sum-of-squares / dot reduction and stay zero through the math).
    fin_p = _round_up(Fin, 128)
    fout_p = _round_up(Fout, 128)

    # ---- row tile + VMEM budget sizing --------------------------------------
    cap = _vmem_capacity_bytes()
    budget = int(cap * 0.75)         # headroom for compiler-internal scratch

    def tile_bytes(tm_, w_buffers):
        xb = 2 * tm_ * fin_p * 4               # pipelined input (double-buffered)
        ob = 2 * tm_ * fout_p * 4              # pipelined output
        wb = w_buffers * fin_p * fout_p * 4    # resident weight
        hbb = (w_buffers * fout_p * 4) if use_bias else 0
        return xb + ob + wb + hbb

    tm = min(_round_up(block_rows, 8), _round_up(max(N, 1), 8))
    while tile_bytes(tm, 1) * 1.25 > budget and tm > 8:
        tm = max(8, _round_up(tm // 2, 8))
    n_pad = _round_up(N, tm)

    # Scoped VMEM limit from actual tiles (sized for the worst case of a
    # double-buffered resident weight so the fallback path also compiles).
    need = tile_bytes(tm, 2)
    vmem_limit = int(min(max(need * 1.25, 32 * 1024 * 1024), max(budget, 32 * 1024 * 1024)))

    # ---- operands (skip padding copies when already lane/row aligned) --------
    xf = x.astype(jnp.float32)
    if Fin == fin_p and N == n_pad:
        xp = xf                                               # no extra HBM pass
    elif Fin == fin_p:
        xp = jnp.pad(xf, ((0, n_pad - N), (0, 0)))            # ragged row tail only
    else:
        xp = jnp.zeros((n_pad, fin_p), jnp.float32).at[:N, :Fin].set(xf)

    # Weight pre-transposed to [Fin, Fout] so the kernel feeds the MXU natively.
    # NOTE: in a real module this transpose/pad would be done once at init.
    wt = weight.astype(jnp.float32).T
    if Fin == fin_p and Fout == fout_p:
        wp = wt
    else:
        wp = jnp.zeros((fin_p, fout_p), jnp.float32).at[:Fin, :Fout].set(wt)

    operands = [xp, wp]
    if use_bias:
        # Row-independent bias path hoisted out of the kernel (computed once):
        # hyp_bias = proj(expmap0(proj_tan0(bias), c), c); proj_tan0 == identity.
        cf = jnp.float32(c)
        hyp_bias = _proj(_expmap0(bias.astype(jnp.float32).reshape(1, -1), cf), cf)  # (1, Fout)
        if Fout == fout_p:
            hbp = hyp_bias
        else:
            hbp = jnp.zeros((1, fout_p), jnp.float32).at[:, :Fout].set(hyp_bias)
        y2 = jnp.sum(hyp_bias * hyp_bias).reshape(1).astype(jnp.float32)  # hoisted reduction
        operands += [hbp, y2]

    try:
        out = _build_pallas_call(n_pad, tm, fin_p, fout_p, c, sqrt_c, use_bias,
                                 vmem_limit, single_buffer_resident=True)(*operands)
    except Exception:
        # Fallback for toolchains that reject single-buffer pipeline_mode; identical math.
        out = _build_pallas_call(n_pad, tm, fin_p, fout_p, c, sqrt_c, use_bias,
                                 vmem_limit, single_buffer_resident=False)(*operands)
    return out[:N, :Fout]


# ----------------------------- main -------------------------------------------

if __name__ == "__main__":
    # HypLinear(manifold=PoincareBall, in_features=32, out_features=32,
    #           c=1.0, dropout=0.0, use_bias=True), eval mode.
    N, IN_F, OUT_F = 8, 32, 32
    c = 1.0

    key = jax.random.PRNGKey(0)
    kx, kw, kb = jax.random.split(key, 3)

    # Points on the Poincare ball: small tangent vectors projected in.
    x = 0.1 * jax.random.normal(kx, (N, IN_F), dtype=jnp.float32)
    x = _proj(x, jnp.float32(c))

    # xavier_uniform_(weight, gain=sqrt(2)): U(-a, a), a = gain*sqrt(6/(fan_in+fan_out))
    a = math.sqrt(2.0) * math.sqrt(6.0 / (IN_F + OUT_F))
    weight = jax.random.uniform(kw, (OUT_F, IN_F), dtype=jnp.float32, minval=-a, maxval=a)
    # Module init is constant_(bias, 0); use a small nonzero bias so the
    # mobius_add / bias path is actually exercised by the check.
    bias = 0.05 * jax.random.normal(kb, (1, OUT_F), dtype=jnp.float32)

    out = jax.block_until_ready(hyp_linear(x, weight, bias, c, use_bias=True))
    ref = hyp_linear_ref(x, weight, bias, c, use_bias=True)
    assert out.shape == (N, OUT_F)
    assert bool(jnp.allclose(out, ref, atol=1e-5, rtol=1e-5)), "mismatch vs reference (bias)"

    out_nb = jax.block_until_ready(hyp_linear(x, weight, bias, c, use_bias=False))
    ref_nb = hyp_linear_ref(x, weight, bias, c, use_bias=False)
    assert bool(jnp.allclose(out_nb, ref_nb, atol=1e-5, rtol=1e-5)), "mismatch vs reference (no bias)"

    print("KERNEL_OK")
</pallas_src>

<mosaic_0001>
module attributes {stable_mosaic.version = 11 : i64} {
  func.func @_hyplinear_kernel(%arg0: i32, %arg1: memref<8x128xf32, #tpu.memory_space<vmem>>, %arg2: memref<128x128xf32, #tpu.memory_space<vmem>>, %arg3: memref<1x128xf32, #tpu.memory_space<vmem>>, %arg4: memref<1xf32, #tpu.memory_space<smem>>, %arg5: memref<8x128xf32, #tpu.memory_space<vmem>>) attributes {dimension_semantics = [#tpu.dimension_semantics<parallel>], iteration_bounds = array<i64: 1>, scalar_prefetch = 0 : i64, scratch_operands = 0 : i64, tpu.core_type = #tpu.core_type<tc>, window_params = [{transform_indices = @transform_0, window_bounds = array<i64: 8, 128>}, {pipeline_mode = #tpu.pipeline_mode<synchronous>, transform_indices = @transform_1, window_bounds = array<i64: 128, 128>}, {pipeline_mode = #tpu.pipeline_mode<synchronous>, transform_indices = @transform_2, window_bounds = array<i64: 1, 128>}, {transform_indices = @transform_3, window_bounds = array<i64: 1>}, {transform_indices = @transform_4, window_bounds = array<i64: 8, 128>}]} {
    %c0 = arith.constant 0 : index
    %c0_0 = arith.constant 0 : index
    %0 = vector.load %arg1[%c0, %c0_0] : memref<8x128xf32, #tpu.memory_space<vmem>>, vector<8x128xf32>
    %c0_1 = arith.constant 0 : index
    %c0_2 = arith.constant 0 : index
    %1 = vector.load %arg2[%c0_1, %c0_2] : memref<128x128xf32, #tpu.memory_space<vmem>>, vector<128x128xf32>
    %2 = arith.mulf %0, %0 : vector<8x128xf32>
    %cst = arith.constant dense<0.000000e+00> : vector<8xf32>
    %3 = vector.multi_reduction <add>, %2, %cst [1] : vector<8x128xf32> to vector<8xf32>
    %4 = vector.shape_cast %3 : vector<8xf32> to vector<8x1xf32>
    %5 = math.sqrt %4 : vector<8x1xf32>
    %cst_3 = arith.constant 1.000000e-15 : f32
    %6 = vector.broadcast %cst_3 : f32 to vector<8x1xf32>
    %7 = arith.maximumf %5, %6 : vector<8x1xf32>
    %cst_4 = arith.constant dense<0.000000e+00> : vector<8x128xf32>
    %8 = tpu.matmul %0, %1, %cst_4 {dimension_numbers = #tpu.dot_dimension_numbers<[1], [0], [0], [1], [0, 0, 1, 1], [], []>} : vector<8x128xf32>, vector<128x128xf32>, vector<8x128xf32> -> vector<8x128xf32>
    %9 = arith.mulf %8, %8 : vector<8x128xf32>
    %cst_5 = arith.constant dense<0.000000e+00> : vector<8xf32>
    %10 = vector.multi_reduction <add>, %9, %cst_5 [1] : vector<8x128xf32> to vector<8xf32>
    %11 = vector.shape_cast %10 : vector<8xf32> to vector<8x1xf32>
    %12 = math.sqrt %11 : vector<8x1xf32>
    %cst_6 = arith.constant 1.000000e-15 : f32
    %13 = vector.broadcast %cst_6 : f32 to vector<8x1xf32>
    %14 = arith.maximumf %12, %13 : vector<8x1xf32>
    %15 = tpu.reciprocal %7 : vector<8x1xf32> -> vector<8x1xf32>
    %cst_7 = arith.constant 1.000000e+00 : f32
    %16 = vector.broadcast %cst_7 : f32 to vector<8x1xf32>
    %17 = arith.mulf %14, %16 : vector<8x1xf32>
    %18 = tpu.reciprocal %17 : vector<8x1xf32> -> vector<8x1xf32>
    %19 = arith.mulf %14, %15 : vector<8x1xf32>
    %cst_8 = arith.constant 1.000000e+00 : f32
    %20 = vector.broadcast %cst_8 : f32 to vector<8x1xf32>
    %21 = arith.mulf %20, %7 : vector<8x1xf32>
    %cst_9 = arith.constant -1.000000e+00 : f32
    %cst_10 = arith.constant 1.000000e+00 : f32
    %22 = vector.broadcast %cst_9 : f32 to vector<8x1xf32>
    %23 = arith.maximumf %22, %21 : vector<8x1xf32>
    %24 = vector.broadcast %cst_10 : f32 to vector<8x1xf32>
    %25 = arith.minimumf %24, %23 : vector<8x1xf32>
    %26 = math.log1p %25 : vector<8x1xf32>
    %cst_11 = arith.constant 0.000000e+00 : f32
    %27 = vector.broadcast %cst_11 : f32 to vector<8x1xf32>
    %28 = arith.subf %27, %25 : vector<8x1xf32>
    %29 = math.log1p %28 : vector<8x1xf32>
    %30 = arith.subf %26, %29 : vector<8x1xf32>
    %cst_12 = arith.constant 5.000000e-01 : f32
    %31 = vector.broadcast %cst_12 : f32 to vector<8x1xf32>
    %32 = arith.mulf %31, %30 : vector<8x1xf32>
    %33 = arith.mulf %19, %32 : vector<8x1xf32>
    %34 = math.tanh %33 : vector<8x1xf32>
    %35 = arith.mulf %34, %18 : vector<8x1xf32>
    %cst_13 = arith.constant 0.000000e+00 : f32
    %36 = vector.broadcast %cst_13 : f32 to vector<8x1xf32>
    %37 = arith.cmpf oeq, %11, %36 : vector<8x1xf32>
    %cst_14 = arith.constant 0.000000e+00 : f32
    %38 = vector.broadcast %cst_14 : f32 to vector<8x1xf32>
    %39 = arith.select %37, %38, %35 : vector<8x1xi1>, vector<8x1xf32>
    %40 = arith.mulf %39, %14 : vector<8x1xf32>
    %cst_15 = arith.constant 0.995999991 : f32
    %41 = vector.broadcast %cst_15 : f32 to vector<8x1xf32>
    %42 = arith.cmpf ogt, %40, %41 : vector<8x1xf32>
    %cst_16 = arith.constant 1.000000e-15 : f32
    %43 = vector.broadcast %cst_16 : f32 to vector<8x1xf32>
    %44 = arith.maximumf %40, %43 : vector<8x1xf32>
    %45 = tpu.reciprocal %44 : vector<8x1xf32> -> vector<8x1xf32>
    %cst_17 = arith.constant 0.995999991 : f32
    %46 = vector.broadcast %cst_17 : f32 to vector<8x1xf32>
    %47 = arith.mulf %46, %45 : vector<8x1xf32>
    %cst_18 = arith.constant 1.000000e+00 : f32
    %48 = vector.broadcast %cst_18 : f32 to vector<8x1xf32>
    %49 = arith.select %42, %47, %48 : vector<8x1xi1>, vector<8x1xf32>
    %50 = arith.mulf %39, %49 : vector<8x1xf32>
    %c0_19 = arith.constant 0 : index
    %c0_20 = arith.constant 0 : index
    %51 = vector.load %arg3[%c0_19, %c0_20] : memref<1x128xf32, #tpu.memory_space<vmem>>, vector<1x128xf32>
    %c0_21 = arith.constant 0 : index
    %52 = memref.load %arg4[%c0_21] : memref<1xf32, #tpu.memory_space<smem>>
    %53 = arith.mulf %50, %50 : vector<8x1xf32>
    %54 = arith.mulf %53, %11 : vector<8x1xf32>
    %55 = vector.broadcast %51 : vector<1x128xf32> to vector<8x128xf32>
    %56 = arith.mulf %8, %55 : vector<8x128xf32>
    %cst_22 = arith.constant dense<0.000000e+00> : vector<8xf32>
    %57 = vector.multi_reduction <add>, %56, %cst_22 [1] : vector<8x128xf32> to vector<8xf32>
    %58 = vector.shape_cast %57 : vector<8xf32> to vector<8x1xf32>
    %59 = arith.mulf %50, %58 : vector<8x1xf32>
    %cst_23 = arith.constant 2.000000e+00 : f32
    %60 = vector.broadcast %cst_23 : f32 to vector<8x1xf32>
    %61 = arith.mulf %60, %59 : vector<8x1xf32>
    %cst_24 = arith.constant 1.000000e+00 : f32
    %62 = vector.broadcast %cst_24 : f32 to vector<8x1xf32>
    %63 = arith.addf %62, %61 : vector<8x1xf32>
    %cst_25 = arith.constant 1.000000e+00 : f32
    %64 = arith.mulf %cst_25, %52 : f32
    %65 = vector.broadcast %64 : f32 to vector<8x1xf32>
    %66 = arith.mulf %65, %54 : vector<8x1xf32>
    %67 = arith.addf %63, %66 : vector<8x1xf32>
    %cst_26 = arith.constant 1.000000e-15 : f32
    %68 = vector.broadcast %cst_26 : f32 to vector<8x1xf32>
    %69 = arith.maximumf %67, %68 : vector<8x1xf32>
    %70 = tpu.reciprocal %69 : vector<8x1xf32> -> vector<8x1xf32>
    %cst_27 = arith.constant 1.000000e+00 : f32
    %71 = vector.broadcast %cst_27 : f32 to vector<8x1xf32>
    %72 = arith.addf %71, %61 : vector<8x1xf32>
    %cst_28 = arith.constant 1.000000e+00 : f32
    %73 = arith.mulf %cst_28, %52 : f32
    %74 = vector.broadcast %73 : f32 to vector<8x1xf32>
    %75 = arith.addf %72, %74 : vector<8x1xf32>
    %76 = arith.mulf %75, %50 : vector<8x1xf32>
    %77 = arith.mulf %76, %70 : vector<8x1xf32>
    %cst_29 = arith.constant 1.000000e+00 : f32
    %78 = vector.broadcast %cst_29 : f32 to vector<8x1xf32>
    %79 = arith.mulf %78, %54 : vector<8x1xf32>
    %cst_30 = arith.constant 1.000000e+00 : f32
    %80 = vector.broadcast %cst_30 : f32 to vector<8x1xf32>
    %81 = arith.subf %80, %79 : vector<8x1xf32>
    %82 = arith.mulf %81, %70 : vector<8x1xf32>
    %83 = vector.broadcast %77 : vector<8x1xf32> to vector<8x128xf32>
    %84 = arith.mulf %83, %8 : vector<8x128xf32>
    %85 = vector.broadcast %82 : vector<8x1xf32> to vector<8x128xf32>
    %86 = vector.broadcast %51 : vector<1x128xf32> to vector<8x128xf32>
    %87 = arith.mulf %85, %86 : vector<8x128xf32>
    %88 = arith.addf %84, %87 : vector<8x128xf32>
    %89 = arith.mulf %88, %88 : vector<8x128xf32>
    %cst_31 = arith.constant dense<0.000000e+00> : vector<8xf32>
    %90 = vector.multi_reduction <add>, %89, %cst_31 [1] : vector<8x128xf32> to vector<8xf32>
    %91 = vector.shape_cast %90 : vector<8xf32> to vector<8x1xf32>
    %92 = math.sqrt %91 : vector<8x1xf32>
    %cst_32 = arith.constant 1.000000e-15 : f32
    %93 = vector.broadcast %cst_32 : f32 to vector<8x1xf32>
    %94 = arith.maximumf %92, %93 : vector<8x1xf32>
    %cst_33 = arith.constant 0.995999991 : f32
    %95 = vector.broadcast %cst_33 : f32 to vector<8x1xf32>
    %96 = arith.cmpf ogt, %94, %95 : vector<8x1xf32>
    %97 = tpu.reciprocal %94 : vector<8x1xf32> -> vector<8x1xf32>
    %cst_34 = arith.constant 0.995999991 : f32
    %98 = vector.broadcast %cst_34 : f32 to vector<8x1xf32>
    %99 = arith.mulf %98, %97 : vector<8x1xf32>
    %cst_35 = arith.constant 1.000000e+00 : f32
    %100 = vector.broadcast %cst_35 : f32 to vector<8x1xf32>
    %101 = arith.select %96, %99, %100 : vector<8x1xi1>, vector<8x1xf32>
    %102 = vector.broadcast %101 : vector<8x1xf32> to vector<8x128xf32>
    %103 = arith.mulf %102, %88 : vector<8x128xf32>
    %c0_36 = arith.constant 0 : index
    %c0_37 = arith.constant 0 : index
    %104 = vector.load %arg5[%c0_36, %c0_37] : memref<8x128xf32, #tpu.memory_space<vmem>>, vector<8x128xf32>
    tpu.vector_store %arg5[%c0_36, %c0_37], %103 {strides = array<i32>} : memref<8x128xf32, #tpu.memory_space<vmem>>, vector<8x128xf32>,
    return
  }
  func.func @transform_0(%arg0: i32) -> (i32, i32) {
    %c0_i32 = arith.constant 0 : i32
    %c0_i32_0 = arith.constant 0 : i32
    return %arg0, %c0_i32 : i32, i32
  }
  func.func @transform_1(%arg0: i32) -> (i32, i32) {
    %c0_i32 = arith.constant 0 : i32
    %c0_i32_0 = arith.constant 0 : i32
    %c0_i32_1 = arith.constant 0 : i32
    return %c0_i32, %c0_i32_0 : i32, i32
  }
  func.func @transform_2(%arg0: i32) -> (i32, i32) {
    %c0_i32 = arith.constant 0 : i32
    %c0_i32_0 = arith.constant 0 : i32
    %c0_i32_1 = arith.constant 0 : i32
    return %c0_i32, %c0_i32_0 : i32, i32
  }
  func.func @transform_3(%arg0: i32) -> i32 {
    %c0_i32 = arith.constant 0 : i32
    %c0_i32_0 = arith.constant 0 : i32
    return %c0_i32 : i32
  }
  func.func @transform_4(%arg0: i32) -> (i32, i32) {
    %c0_i32 = arith.constant 0 : i32
    %c0_i32_0 = arith.constant 0 : i32
    return %arg0, %c0_i32 : i32, i32
  }
}

module attributes {stable_mosaic.version = 11 : i64} {
  func.func @_hyplinear_kernel(%arg0: i32, %arg1: memref<8x128xf32, #tpu.memory_space<vmem>>, %arg2: memref<128x128xf32, #tpu.memory_space<vmem>>, %arg3: memref<1x128xf32, #tpu.memory_space<vmem>>, %arg4: memref<1xf32, #tpu.memory_space<smem>>, %arg5: memref<8x128xf32, #tpu.memory_space<vmem>>) attributes {dimension_semantics = [#tpu.dimension_semantics<parallel>], iteration_bounds = array<i64: 1>, scalar_prefetch = 0 : i64, scratch_operands = 0 : i64, tpu.core_type = #tpu.core_type<tc>, window_params = [{transform_indices = @transform_0, window_bounds = array<i64: 8, 128>}, {pipeline_mode = #tpu.pipeline_mode<synchronous>, transform_indices = @transform_1, window_bounds = array<i64: 128, 128>}, {pipeline_mode = #tpu.pipeline_mode<synchronous>, transform_indices = @transform_2, window_bounds = array<i64: 1, 128>}, {transform_indices = @transform_3, window_bounds = array<i64: 1>}, {transform_indices = @transform_4, window_bounds = array<i64: 8, 128>}]} {
    %c0 = arith.constant 0 : index
    %c0_0 = arith.constant 0 : index
    %0 = vector.load %arg1[%c0, %c0_0] : memref<8x128xf32, #tpu.memory_space<vmem>>, vector<8x128xf32>
    %c0_1 = arith.constant 0 : index
    %c0_2 = arith.constant 0 : index
    %1 = vector.load %arg2[%c0_1, %c0_2] : memref<128x128xf32, #tpu.memory_space<vmem>>, vector<128x128xf32>
    %2 = arith.mulf %0, %0 : vector<8x128xf32>
    %cst = arith.constant dense<0.000000e+00> : vector<8xf32>
    %3 = vector.multi_reduction <add>, %2, %cst [1] : vector<8x128xf32> to vector<8xf32>
    %4 = vector.shape_cast %3 : vector<8xf32> to vector<8x1xf32>
    %5 = math.sqrt %4 : vector<8x1xf32>
    %cst_3 = arith.constant 1.000000e-15 : f32
    %6 = vector.broadcast %cst_3 : f32 to vector<8x1xf32>
    %7 = arith.maximumf %5, %6 : vector<8x1xf32>
    %cst_4 = arith.constant dense<0.000000e+00> : vector<8x128xf32>
    %8 = tpu.matmul %0, %1, %cst_4 {dimension_numbers = #tpu.dot_dimension_numbers<[1], [0], [0], [1], [0, 0, 1, 1], [], []>} : vector<8x128xf32>, vector<128x128xf32>, vector<8x128xf32> -> vector<8x128xf32>
    %9 = arith.mulf %8, %8 : vector<8x128xf32>
    %cst_5 = arith.constant dense<0.000000e+00> : vector<8xf32>
    %10 = vector.multi_reduction <add>, %9, %cst_5 [1] : vector<8x128xf32> to vector<8xf32>
    %11 = vector.shape_cast %10 : vector<8xf32> to vector<8x1xf32>
    %12 = math.sqrt %11 : vector<8x1xf32>
    %cst_6 = arith.constant 1.000000e-15 : f32
    %13 = vector.broadcast %cst_6 : f32 to vector<8x1xf32>
    %14 = arith.maximumf %12, %13 : vector<8x1xf32>
    %15 = tpu.reciprocal %7 : vector<8x1xf32> -> vector<8x1xf32>
    %cst_7 = arith.constant 1.000000e+00 : f32
    %16 = vector.broadcast %cst_7 : f32 to vector<8x1xf32>
    %17 = arith.mulf %14, %16 : vector<8x1xf32>
    %18 = tpu.reciprocal %17 : vector<8x1xf32> -> vector<8x1xf32>
    %19 = arith.mulf %14, %15 : vector<8x1xf32>
    %cst_8 = arith.constant 1.000000e+00 : f32
    %20 = vector.broadcast %cst_8 : f32 to vector<8x1xf32>
    %21 = arith.mulf %20, %7 : vector<8x1xf32>
    %cst_9 = arith.constant -1.000000e+00 : f32
    %cst_10 = arith.constant 1.000000e+00 : f32
    %22 = vector.broadcast %cst_9 : f32 to vector<8x1xf32>
    %23 = arith.maximumf %22, %21 : vector<8x1xf32>
    %24 = vector.broadcast %cst_10 : f32 to vector<8x1xf32>
    %25 = arith.minimumf %24, %23 : vector<8x1xf32>
    %26 = math.log1p %25 : vector<8x1xf32>
    %cst_11 = arith.constant 0.000000e+00 : f32
    %27 = vector.broadcast %cst_11 : f32 to vector<8x1xf32>
    %28 = arith.subf %27, %25 : vector<8x1xf32>
    %29 = math.log1p %28 : vector<8x1xf32>
    %30 = arith.subf %26, %29 : vector<8x1xf32>
    %cst_12 = arith.constant 5.000000e-01 : f32
    %31 = vector.broadcast %cst_12 : f32 to vector<8x1xf32>
    %32 = arith.mulf %31, %30 : vector<8x1xf32>
    %33 = arith.mulf %19, %32 : vector<8x1xf32>
    %34 = math.tanh %33 : vector<8x1xf32>
    %35 = arith.mulf %34, %18 : vector<8x1xf32>
    %cst_13 = arith.constant 0.000000e+00 : f32
    %36 = vector.broadcast %cst_13 : f32 to vector<8x1xf32>
    %37 = arith.cmpf oeq, %11, %36 : vector<8x1xf32>
    %cst_14 = arith.constant 0.000000e+00 : f32
    %38 = vector.broadcast %cst_14 : f32 to vector<8x1xf32>
    %39 = arith.select %37, %38, %35 : vector<8x1xi1>, vector<8x1xf32>
    %40 = arith.mulf %39, %14 : vector<8x1xf32>
    %cst_15 = arith.constant 0.995999991 : f32
    %41 = vector.broadcast %cst_15 : f32 to vector<8x1xf32>
    %42 = arith.cmpf ogt, %40, %41 : vector<8x1xf32>
    %cst_16 = arith.constant 1.000000e-15 : f32
    %43 = vector.broadcast %cst_16 : f32 to vector<8x1xf32>
    %44 = arith.maximumf %40, %43 : vector<8x1xf32>
    %45 = tpu.reciprocal %44 : vector<8x1xf32> -> vector<8x1xf32>
    %cst_17 = arith.constant 0.995999991 : f32
    %46 = vector.broadcast %cst_17 : f32 to vector<8x1xf32>
    %47 = arith.mulf %46, %45 : vector<8x1xf32>
    %cst_18 = arith.constant 1.000000e+00 : f32
    %48 = vector.broadcast %cst_18 : f32 to vector<8x1xf32>
    %49 = arith.select %42, %47, %48 : vector<8x1xi1>, vector<8x1xf32>
    %50 = arith.mulf %39, %49 : vector<8x1xf32>
    %c0_19 = arith.constant 0 : index
    %c0_20 = arith.constant 0 : index
    %51 = vector.load %arg3[%c0_19, %c0_20] : memref<1x128xf32, #tpu.memory_space<vmem>>, vector<1x128xf32>
    %c0_21 = arith.constant 0 : index
    %52 = memref.load %arg4[%c0_21] : memref<1xf32, #tpu.memory_space<smem>>
    %53 = arith.mulf %50, %50 : vector<8x1xf32>
    %54 = arith.mulf %53, %11 : vector<8x1xf32>
    %55 = vector.broadcast %51 : vector<1x128xf32> to vector<8x128xf32>
    %56 = arith.mulf %8, %55 : vector<8x128xf32>
    %cst_22 = arith.constant dense<0.000000e+00> : vector<8xf32>
    %57 = vector.multi_reduction <add>, %56, %cst_22 [1] : vector<8x128xf32> to vector<8xf32>
    %58 = vector.shape_cast %57 : vector<8xf32> to vector<8x1xf32>
    %59 = arith.mulf %50, %58 : vector<8x1xf32>
    %cst_23 = arith.constant 2.000000e+00 : f32
    %60 = vector.broadcast %cst_23 : f32 to vector<8x1xf32>
    %61 = arith.mulf %60, %59 : vector<8x1xf32>
    %cst_24 = arith.constant 1.000000e+00 : f32
    %62 = vector.broadcast %cst_24 : f32 to vector<8x1xf32>
    %63 = arith.addf %62, %61 : vector<8x1xf32>
    %cst_25 = arith.constant 1.000000e+00 : f32
    %64 = arith.mulf %cst_25, %52 : f32
    %65 = vector.broadcast %64 : f32 to vector<8x1xf32>
    %66 = arith.mulf %65, %54 : vector<8x1xf32>
    %67 = arith.addf %63, %66 : vector<8x1xf32>
    %cst_26 = arith.constant 1.000000e-15 : f32
    %68 = vector.broadcast %cst_26 : f32 to vector<8x1xf32>
    %69 = arith.maximumf %67, %68 : vector<8x1xf32>
    %70 = tpu.reciprocal %69 : vector<8x1xf32> -> vector<8x1xf32>
    %cst_27 = arith.constant 1.000000e+00 : f32
    %71 = vector.broadcast %cst_27 : f32 to vector<8x1xf32>
    %72 = arith.addf %71, %61 : vector<8x1xf32>
    %cst_28 = arith.constant 1.000000e+00 : f32
    %73 = arith.mulf %cst_28, %52 : f32
    %74 = vector.broadcast %73 : f32 to vector<8x1xf32>
    %75 = arith.addf %72, %74 : vector<8x1xf32>
    %76 = arith.mulf %75, %50 : vector<8x1xf32>
    %77 = arith.mulf %76, %70 : vector<8x1xf32>
    %cst_29 = arith.constant 1.000000e+00 : f32
    %78 = vector.broadcast %cst_29 : f32 to vector<8x1xf32>
    %79 = arith.mulf %78, %54 : vector<8x1xf32>
    %cst_30 = arith.constant 1.000000e+00 : f32
    %80 = vector.broadcast %cst_30 : f32 to vector<8x1xf32>
    %81 = arith.subf %80, %79 : vector<8x1xf32>
    %82 = arith.mulf %81, %70 : vector<8x1xf32>
    %83 = vector.broadcast %77 : vector<8x1xf32> to vector<8x128xf32>
    %84 = arith.mulf %83, %8 : vector<8x128xf32>
    %85 = vector.broadcast %82 : vector<8x1xf32> to vector<8x128xf32>
    %86 = vector.broadcast %51 : vector<1x128xf32> to vector<8x128xf32>
    %87 = arith.mulf %85, %86 : vector<8x128xf32>
    %88 = arith.addf %84, %87 : vector<8x128xf32>
    %89 = arith.mulf %88, %88 : vector<8x128xf32>
    %cst_31 = arith.constant dense<0.000000e+00> : vector<8xf32>
    %90 = vector.multi_reduction <add>, %89, %cst_31 [1] : vector<8x128xf32> to vector<8xf32>
    %91 = vector.shape_cast %90 : vector<8xf32> to vector<8x1xf32>
    %92 = math.sqrt %91 : vector<8x1xf32>
    %cst_32 = arith.constant 1.000000e-15 : f32
    %93 = vector.broadcast %cst_32 : f32 to vector<8x1xf32>
    %94 = arith.maximumf %92, %93 : vector<8x1xf32>
    %cst_33 = arith.constant 0.995999991 : f32
    %95 = vector.broadcast %cst_33 : f32 to vector<8x1xf32>
    %96 = arith.cmpf ogt, %94, %95 : vector<8x1xf32>
    %97 = tpu.reciprocal %94 : vector<8x1xf32> -> vector<8x1xf32>
    %cst_34 = arith.constant 0.995999991 : f32
    %98 = vector.broadcast %cst_34 : f32 to vector<8x1xf32>
    %99 = arith.mulf %98, %97 : vector<8x1xf32>
    %cst_35 = arith.constant 1.000000e+00 : f32
    %100 = vector.broadcast %cst_35 : f32 to vector<8x1xf32>
    %101 = arith.select %96, %99, %100 : vector<8x1xi1>, vector<8x1xf32>
    %102 = vector.broadcast %101 : vector<8x1xf32> to vector<8x128xf32>
    %103 = arith.mulf %102, %88 : vector<8x128xf32>
    %c0_36 = arith.constant 0 : index
    %c0_37 = arith.constant 0 : index
    %104 = vector.load %arg5[%c0_36, %c0_37] : memref<8x128xf32, #tpu.memory_space<vmem>>, vector<8x128xf32>
    tpu.vector_store %arg5[%c0_36, %c0_37], %103 {strides = array<i32>} : memref<8x128xf32, #tpu.memory_space<vmem>>, vector<8x128xf32>,
    return
  }
  func.func @transform_0(%arg0: i32) -> (i32, i32) {
    %c0_i32 = arith.constant 0 : i32
    %c0_i32_0 = arith.constant 0 : i32
    return %arg0, %c0_i32 : i32, i32
  }
  func.func @transform_1(%arg0: i32) -> (i32, i32) {
    %c0_i32 = arith.constant 0 : i32
    %c0_i32_0 = arith.constant 0 : i32
    %c0_i32_1 = arith.constant 0 : i32
    return %c0_i32, %c0_i32_0 : i32, i32
  }
  func.func @transform_2(%arg0: i32) -> (i32, i32) {
    %c0_i32 = arith.constant 0 : i32
    %c0_i32_0 = arith.constant 0 : i32
    %c0_i32_1 = arith.constant 0 : i32
    return %c0_i32, %c0_i32_0 : i32, i32
  }
  func.func @transform_3(%arg0: i32) -> i32 {
    %c0_i32 = arith.constant 0 : i32
    %c0_i32_0 = arith.constant 0 : i32
    return %c0_i32 : i32
  }
  func.func @transform_4(%arg0: i32) -> (i32, i32) {
    %c0_i32 = arith.constant 0 : i32
    %c0_i32_0 = arith.constant 0 : i32
    return %arg0, %c0_i32 : i32, i32
  }
}

</mosaic_0001>

<llo_original>
// kernel: tpu_custom_call.1
$region0: #{tpu_custom_call.1}
  #allocation0 [shape = 'u32[]', space=smem, size = 0x4, offset = 0x4, fixed_abs, tag = 'smem constant byte address 0x4 - core index']
  #allocation1 [shape = 'u32[144,128]{1,0:T(1,128)}', space=vmem, size = 0x12000, scoped, tag = 'internal scratch']
  #allocation2 [shape = 'f32[1]{0:T(128)S(6)}', space=smem, size = 0x200, scoped, tag = 'scoped memory for tpu_custom_call.1']
  %s0 = inlined_call_operand.hbm [shape: f32[8,128], index: 0, kind: input, shape index: {}]
  %s1 = inlined_call_operand.hbm [shape: f32[128,128], index: 1, kind: input, shape index: {}]
  %s2 = inlined_call_operand.vmem [shape: f32[1,128], index: 2, kind: input, shape index: {}]
  %s3 = inlined_call_operand.<no memory space> [shape: f32[1], index: 3, kind: input, shape index: {}]
  %s4 = inlined_call_operand.hbm [shape: f32[8,128], index: 4, kind: output, shape index: {}]
  %s5 = sld [smem:[#allocation0]]
  $region34: #{tpu_custom_call.1} parent=0
    _
  %s7 = ssub.s32 1, %s5
  %s8 = scalar_select 0, %s7, %s5
  %9 = sst [smem:[#allocation2]] %s3
  $region1: #{tpu_custom_call.1} parent=0
    #allocation3 [shape = 'u8[4096]{0}', space=vmem, size = 0x1000, scoped, tag = 'input window, operand 0, single buffered']
    #allocation4 [shape = 's32[1]{0}', space=sflag, size = 0x4, scoped, tag = 'scoped memory for tpu_custom_call.1']
    #allocation5 [shape = 's32[1]{0}', space=sflag, size = 0x4, scoped, tag = 'scoped memory for tpu_custom_call.1']
    #allocation6 [shape = 'u8[65536]{0}', space=vmem, size = 0x10000, scoped, tag = 'input window, operand 1, single buffered']
    #allocation7 [shape = 's32[1]{0}', space=sflag, size = 0x4, scoped, tag = 'scoped memory for tpu_custom_call.1']
    #allocation8 [shape = 'u8[4096]{0}', space=vmem, size = 0x1000, scoped, tag = 'output window, operand 0, single buffered']
    %10 = vsyncpa [#allocation4], 0
    %11 = vsyncpa [#allocation7], 0
    %12 = vsyncpa [#allocation5], 0
    // Predicated region
    $region2: #{tpu_custom_call.1} parent=1 // pred_check
      _
    $region3: #{tpu_custom_call.1} parent=1 // pred_check_branch
      %14 = sbr.rel (0) target = $region5
    $region4: #{tpu_custom_call.1} parent=1 // pred_region
      %s16 = ssub.s32 128, 128
      %17 = vsyncadd [#allocation4], %s16
      %s19 = sshll.u32 [#allocation3], 4
      %s20 = int_to_ptr.vmem [resolvable:$true] %s19
      %22 = dma.hbm_to_vmem [thread:$0]  %s0, 128, %s20, [#allocation4]
    $region5: #{tpu_custom_call.1} parent=1 // pred_fallthru
      _
    // Predicated region
    $region6: #{tpu_custom_call.1} parent=1 // pred_check
      _
    $region7: #{tpu_custom_call.1} parent=1 // pred_check_branch
      %24 = sbr.rel (0) target = $region9
    $region8: #{tpu_custom_call.1} parent=1 // pred_region
      %s26 = ssub.s32 2048, 2048
      %27 = vsyncadd [#allocation7], %s26
      %s28 = sshll.u32 [#allocation6], 4
      %s29 = int_to_ptr.vmem [resolvable:$true] %s28
      %34 = dma.hbm_to_vmem [thread:$0]  %s1, 2048, %s29, [#allocation7], 128, 128, 8
    $region9: #{tpu_custom_call.1} parent=1 // pred_fallthru
      _
    // Predicated region
    $region10: #{tpu_custom_call.1} parent=1 // pred_check
      _
    $region11: #{tpu_custom_call.1} parent=1 // pred_check_branch
      %36 = sbr.rel (0) target = $region13
    $region12: #{tpu_custom_call.1} parent=1 // pred_region
      _
    $region13: #{tpu_custom_call.1} parent=1 // pred_fallthru
      _
    // Predicated region
    $region14: #{tpu_custom_call.1} parent=1 // pred_check
      _
    $region15: #{tpu_custom_call.1} parent=1 // pred_check_branch
      %38 = sbr.rel (0) target = $region17
    $region16: #{tpu_custom_call.1} parent=1 // pred_region
      _
    $region17: #{tpu_custom_call.1} parent=1 // pred_fallthru
      _
    // Predicated region
    $region18: #{tpu_custom_call.1} parent=1 // pred_check
      _
    $region19: #{tpu_custom_call.1} parent=1 // pred_check_branch
      %40 = sbr.rel (0) target = $region21
    $region20: #{tpu_custom_call.1} parent=1 // pred_region
      %41 = dma.done [#allocation4], 128
    $region21: #{tpu_custom_call.1} parent=1 // pred_fallthru
      _
    // Predicated region
    $region22: #{tpu_custom_call.1} parent=1 // pred_check
      _
    $region23: #{tpu_custom_call.1} parent=1 // pred_check_branch
      %43 = sbr.rel (0) target = $region25
    $region24: #{tpu_custom_call.1} parent=1 // pred_region
      %44 = dma.done [#allocation7], 2048
    $region25: #{tpu_custom_call.1} parent=1 // pred_fallthru
      _
    %v45 = vld [vmem:[#allocation3] sm:$0xff]
    %v46 = vld [vmem:[#allocation6] sm:$0xff]
    %v47 = vld [vmem:[#allocation6 + $0x8] sm:$0xff]
    %v48 = vld [vmem:[#allocation6 + $0x10] sm:$0xff]
    %v49 = vld [vmem:[#allocation6 + $0x18] sm:$0xff]
    %v50 = vld [vmem:[#allocation6 + $0x20] sm:$0xff]
    %v51 = vld [vmem:[#allocation6 + $0x28] sm:$0xff]
    %v52 = vld [vmem:[#allocation6 + $0x30] sm:$0xff]
    %v53 = vld [vmem:[#allocation6 + $0x38] sm:$0xff]
    %v54 = vld [vmem:[#allocation6 + $0x40] sm:$0xff]
    %v55 = vld [vmem:[#allocation6 + $0x48] sm:$0xff]
    %v56 = vld [vmem:[#allocation6 + $0x50] sm:$0xff]
    %v57 = vld [vmem:[#allocation6 + $0x58] sm:$0xff]
    %v58 = vld [vmem:[#allocation6 + $0x60] sm:$0xff]
    %v59 = vld [vmem:[#allocation6 + $0x68] sm:$0xff]
    %v60 = vld [vmem:[#allocation6 + $0x70] sm:$0xff]
    %v61 = vld [vmem:[#allocation6 + $0x78] sm:$0xff]
    %v62 = vmul.f32 %v45, %v45
    %63 = vadd.xlane.f32.xlu0 %v62
    %v64 = vpop.xlane.xlu0 %63
    %v65 = vrsqrt.pop %v64
    %v66 = vmul.f32 %v64, %v65
    %vm67 = vcmp.eq.f32.partialorder %v64, inf
    %v68 = vsel %vm67, %v64, %v66
    %vm69 = vcmp.eq.f32.partialorder %v64, 0.0
    %v70 = vand.u32 %v64, 2147483648
    %v71 = vsel %vm69, %v70, %v68
    %v72 = vmax.f32 %v71, 1e-15
    %73 = vmatprep.subr.mxu0 0.0
    %74 = vmatpush1.msra.mxu0 %v46
    %75 = vmatprep.subr.mxu0 0.0
    %76 = vmatpush1.msra.mxu0 %v47
    %77 = vmatprep.subr.mxu0 0.0
    %78 = vmatpush1.msra.mxu0 %v48
    %79 = vmatprep.subr.mxu0 0.0
    %80 = vmatpush1.msra.mxu0 %v49
    %81 = vmatprep.subr.mxu0 0.0
    %82 = vmatpush1.msra.mxu0 %v50
    %83 = vmatprep.subr.mxu0 0.0
    %84 = vmatpush1.msra.mxu0 %v51
    %85 = vmatprep.subr.mxu0 0.0
    %86 = vmatpush1.msra.mxu0 %v52
    %87 = vmatprep.subr.mxu0 0.0
    %88 = vmatpush1.msra.mxu0 %v53
    %89 = vmatprep.subr.mxu0 0.0
    %90 = vmatpush1.msra.mxu0 %v54
    %91 = vmatprep.subr.mxu0 0.0
    %92 = vmatpush1.msra.mxu0 %v55
    %93 = vmatprep.subr.mxu0 0.0
    %94 = vmatpush1.msra.mxu0 %v56
    %95 = vmatprep.subr.mxu0 0.0
    %96 = vmatpush1.msra.mxu0 %v57
    %97 = vmatprep.subr.mxu0 0.0
    %98 = vmatpush1.msra.mxu0 %v58
    %99 = vmatprep.subr.mxu0 0.0
    %100 = vmatpush1.msra.mxu0 %v59
    %101 = vmatprep.subr.mxu0 0.0
    %102 = vmatpush1.msra.mxu0 %v60
    %103 = vmatprep.subr.mxu0 0.0
    %104 = vmatpush1.msra.mxu0 %v61
    %105 = vmatprep.subr.mxu0 0.0
    %106 = vmatpush1.msra.mxu0 0.0
    %107 = vmatprep.subr.mxu0 0.0
    %108 = vmatpush1.msra.mxu0 0.0
    %109 = vmatprep.subr.mxu0 0.0
    %110 = vmatpush1.msra.mxu0 0.0
    %111 = vmatprep.subr.mxu0 0.0
    %112 = vmatpush1.msra.mxu0 0.0
    %113 = vmatprep.subr.mxu0 0.0
    %114 = vmatpush1.msra.mxu0 0.0
    %115 = vmatprep.subr.mxu0 0.0
    %116 = vmatpush1.msra.mxu0 0.0
    %117 = vmatprep.subr.mxu0 0.0
    %118 = vmatpush1.msra.mxu0 0.0
    %119 = vmatprep.subr.mxu0 0.0
    %120 = vmatpush1.msra.mxu0 0.0
    %121 = vmatprep.subr.mxu0 0.0
    %122 = vmatpush1.msra.mxu0 0.0
    %123 = vmatprep.subr.mxu0 0.0
    %124 = vmatpush1.msra.mxu0 0.0
    %125 = vmatprep.subr.mxu0 0.0
    %126 = vmatpush1.msra.mxu0 0.0
    %127 = vmatprep.subr.mxu0 0.0
    %128 = vmatpush1.msra.mxu0 0.0
    %129 = vmatprep.subr.mxu0 0.0
    %130 = vmatpush1.msra.mxu0 0.0
    %131 = vmatprep.subr.mxu0 0.0
    %132 = vmatpush1.msra.mxu0 0.0
    %133 = vmatprep.subr.mxu0 0.0
    %134 = vmatpush1.msra.mxu0 0.0
    %135 = vmatprep.subr.mxu0 0.0
    %136 = vmatpush1.msra.mxu0 0.0
    %137 = vmatprep.mubr.f32.mxu0 0.0
    %138 = vmatmul.mubr.f32.gmra.mrb[0].mxu0 %v45
    %v139 = vpop.f32.mrb[0].mxu0
    %v140 = vadd.f32 0.0, %v139
    %v141 = vpop.f32.mrb[0].mxu0
    %142 = vdwg.mxu0
    %v143 = vmul.f32 %v140, %v140
    %144 = vadd.xlane.f32.xlu0 %v143
    %v145 = vpop.xlane.xlu0 %144
    %v146 = vrsqrt.pop %v145
    %v147 = vmul.f32 %v145, %v146
    %vm148 = vcmp.eq.f32.partialorder %v145, inf
    %v149 = vsel %vm148, %v145, %v147
    %vm150 = vcmp.eq.f32.partialorder %v145, 0.0
    %v151 = vand.u32 %v145, 2147483648
    %v152 = vsel %vm150, %v151, %v149
    %v153 = vmax.f32 %v152, 1e-15
    %v154 = vrcp.pop %v72
    %v155 = vrcp.pop %v153
    %v156 = vmul.f32 %v153, %v154
    %v157 = vmax.f32 %v72, -1.0
    %v158 = vmin.f32 %v157, 1.0
    %v159 = vadd.f32 %v158, 1.0
    %v160 = vlog2.pop %v159
    %v161 = vmul.f32 %v160, 0.6931472
    %v162 = vmul.f32 -0.5, %v158
    %v163 = vadd.f32 %v162, 1.0
    %v164 = vmul.f32 %v163, %v158
    %v165 = vand.u32 2147483647, %v158
    %vm166 = vcmp.lt.f32.partialorder %v165, 0.0004427343
    %v167 = vsel %vm166, %v164, %v161
    %v168 = vsub.f32 0.0, %v158
    %v169 = vadd.f32 %v168, 1.0
    %v170 = vlog2.pop %v169
    %v171 = vmul.f32 %v170, 0.6931472
    %v172 = vmul.f32 -0.5, %v168
    %v173 = vadd.f32 %v172, 1.0
    %v174 = vmul.f32 %v173, %v168
    %v175 = vand.u32 2147483647, %v168
    %vm176 = vcmp.lt.f32.partialorder %v175, 0.0004427343
    %v177 = vsel %vm176, %v174, %v171
    %v178 = vsub.f32 %v167, %v177
    %v179 = vmul.f32 %v178, 0.5
    %v180 = vmul.f32 %v156, %v179
    %v181 = vtanh.pop %v180
    %v182 = vmul.f32 %v181, %v155
    %vm183 = vcmp.eq.f32.partialorder %v145, 0.0
    %v184 = vsel %vm183, 0.0, %v182
    %v185 = vmul.f32 %v184, %v153
    %vm186 = vcmp.gt.f32.partialorder %v185, 0.996
    %v187 = vmax.f32 %v185, 1e-15
    %v188 = vrcp.pop %v187
    %v189 = vmul.f32 %v188, 0.996
    %v190 = vsel %vm186, %v189, 1.0
    %v191 = vmul.f32 %v184, %v190
    %v192 = vld [vmem:[%s2] sm:$0x1]
    %s193 = sld [smem:[#allocation2]]
    %v194 = vmul.f32 %v191, %v191
    %v195 = vmul.f32 %v194, %v145
    %v197 = vlaneseq
    %v198 = vshrl.u32 %v197, 7
    %v199 = vsub.s32 0, %v198
    %v200 = vrot.slane %v192, %v199
    %v202 = vmul.f32 %v140, %v200
    %203 = vadd.xlane.f32.xlu0 %v202
    %v204 = vpop.xlane.xlu0 %203
    %v205 = vmul.f32 %v191, %v204
    %v206 = vmul.f32 %v205, 2.0
    %v207 = vadd.f32 %v206, 1.0
    %v208 = vstv %s193
    %v209 = vmul.f32 %v208, %v195
    %v210 = vadd.f32 %v207, %v209
    %v211 = vmax.f32 %v210, 1e-15
    %v212 = vrcp.pop %v211
    %v213 = vadd.f32 %v207, %v208
    %v214 = vmul.f32 %v213, %v191
    %v215 = vmul.f32 %v214, %v212
    %v216 = vsub.f32 1.0, %v195
    %v217 = vmul.f32 %v216, %v212
    %v218 = vmul.f32 %v215, %v140
    %v219 = vmul.f32 %v217, %v200
    %v220 = vadd.f32 %v218, %v219
    %v221 = vmul.f32 %v220, %v220
    %222 = vadd.xlane.f32.xlu0 %v221
    %v223 = vpop.xlane.xlu0 %222
    %v224 = vrsqrt.pop %v223
    %v225 = vmul.f32 %v223, %v224
    %vm226 = vcmp.eq.f32.partialorder %v223, inf
    %v227 = vsel %vm226, %v223, %v225
    %vm228 = vcmp.eq.f32.partialorder %v223, 0.0
    %v229 = vand.u32 %v223, 2147483648
    %v230 = vsel %vm228, %v229, %v227
    %v231 = vmax.f32 %v230, 1e-15
    %vm232 = vcmp.gt.f32.partialorder %v231, 0.996
    %v233 = vrcp.pop %v231
    %v234 = vmul.f32 %v233, 0.996
    %v235 = vsel %vm232, %v234, 1.0
    %v236 = vmul.f32 %v235, %v220
    %237 = vst [vmem:[#allocation8] sm:$0xff] %v236
    // Predicated region
    $region26: #{tpu_custom_call.1} parent=1 // pred_check
      _
    $region27: #{tpu_custom_call.1} parent=1 // pred_check_branch
      %239 = sbr.rel (0) target = $region29
    $region28: #{tpu_custom_call.1} parent=1 // pred_region
      %s241 = ssub.s32 128, 128
      %242 = vsyncadd [#allocation5], %s241
      %s244 = sshll.u32 [#allocation8], 4
      %s245 = int_to_ptr.vmem [resolvable:$true] %s244
      %247 = dma.vmem_to_hbm [thread:$0]  %s245, 128, %s4, [#allocation5]
    $region29: #{tpu_custom_call.1} parent=1 // pred_fallthru
      _
    // Predicated region
    $region30: #{tpu_custom_call.1} parent=1 // pred_check
      _
    $region31: #{tpu_custom_call.1} parent=1 // pred_check_branch
      %249 = sbr.rel (0) target = $region33
    $region32: #{tpu_custom_call.1} parent=1 // pred_region
      %250 = dma.done [#allocation5], 128
    $region33: #{tpu_custom_call.1} parent=1 // pred_fallthru
      _
    %251 = vsyncpa [#allocation4], 1
    %252 = vsyncpa [#allocation7], 1
    %253 = vsyncpa [#allocation5], 1

// kernel: tpu_custom_call.1
$region0: #{tpu_custom_call.1}
  #allocation0 [shape = 'u32[]', space=smem, size = 0x4, offset = 0x4, fixed_abs, tag = 'smem constant byte address 0x4 - core index']
  #allocation1 [shape = 'u32[144,128]{1,0:T(1,128)}', space=vmem, size = 0x12000, scoped, tag = 'internal scratch']
  #allocation2 [shape = 'f32[1]{0:T(128)S(6)}', space=smem, size = 0x200, scoped, tag = 'scoped memory for tpu_custom_call.1']
  %s0 = inlined_call_operand.hbm [shape: f32[8,128], index: 0, kind: input, shape index: {}]
  %s1 = inlined_call_operand.hbm [shape: f32[128,128], index: 1, kind: input, shape index: {}]
  %s2 = inlined_call_operand.vmem [shape: f32[1,128], index: 2, kind: input, shape index: {}]
  %s3 = inlined_call_operand.<no memory space> [shape: f32[1], index: 3, kind: input, shape index: {}]
  %s4 = inlined_call_operand.hbm [shape: f32[8,128], index: 4, kind: output, shape index: {}]
  %s5 = sld [smem:[#allocation0]]
  $region34: #{tpu_custom_call.1} parent=0
    _
  %s7 = ssub.s32 1, %s5
  %s8 = scalar_select 0, %s7, %s5
  %9 = sst [smem:[#allocation2]] %s3
  $region1: #{tpu_custom_call.1} parent=0
    #allocation3 [shape = 'u8[4096]{0}', space=vmem, size = 0x1000, scoped, tag = 'input window, operand 0, single buffered']
    #allocation4 [shape = 's32[1]{0}', space=sflag, size = 0x4, scoped, tag = 'scoped memory for tpu_custom_call.1']
    #allocation5 [shape = 's32[1]{0}', space=sflag, size = 0x4, scoped, tag = 'scoped memory for tpu_custom_call.1']
    #allocation6 [shape = 'u8[65536]{0}', space=vmem, size = 0x10000, scoped, tag = 'input window, operand 1, single buffered']
    #allocation7 [shape = 's32[1]{0}', space=sflag, size = 0x4, scoped, tag = 'scoped memory for tpu_custom_call.1']
    #allocation8 [shape = 'u8[4096]{0}', space=vmem, size = 0x1000, scoped, tag = 'output window, operand 0, single buffered']
    %10 = vsyncpa [#allocation4], 0
    %11 = vsyncpa [#allocation7], 0
    %12 = vsyncpa [#allocation5], 0
    // Predicated region
    $region2: #{tpu_custom_call.1} parent=1 // pred_check
      _
    $region3: #{tpu_custom_call.1} parent=1 // pred_check_branch
      %14 = sbr.rel (0) target = $region5
    $region4: #{tpu_custom_call.1} parent=1 // pred_region
      %s16 = ssub.s32 128, 128
      %17 = vsyncadd [#allocation4], %s16
      %s19 = sshll.u32 [#allocation3], 4
      %s20 = int_to_ptr.vmem [resolvable:$true] %s19
      %22 = dma.hbm_to_vmem [thread:$0]  %s0, 128, %s20, [#allocation4]
    $region5: #{tpu_custom_call.1} parent=1 // pred_fallthru
      _
    // Predicated region
    $region6: #{tpu_custom_call.1} parent=1 // pred_check
      _
    $region7: #{tpu_custom_call.1} parent=1 // pred_check_branch
      %24 = sbr.rel (0) target = $region9
    $region8: #{tpu_custom_call.1} parent=1 // pred_region
      %s26 = ssub.s32 2048, 2048
      %27 = vsyncadd [#allocation7], %s26
      %s28 = sshll.u32 [#allocation6], 4
      %s29 = int_to_ptr.vmem [resolvable:$true] %s28
      %34 = dma.hbm_to_vmem [thread:$0]  %s1, 2048, %s29, [#allocation7], 128, 128, 8
    $region9: #{tpu_custom_call.1} parent=1 // pred_fallthru
      _
    // Predicated region
    $region10: #{tpu_custom_call.1} parent=1 // pred_check
      _
    $region11: #{tpu_custom_call.1} parent=1 // pred_check_branch
      %36 = sbr.rel (0) target = $region13
    $region12: #{tpu_custom_call.1} parent=1 // pred_region
      _
    $region13: #{tpu_custom_call.1} parent=1 // pred_fallthru
      _
    // Predicated region
    $region14: #{tpu_custom_call.1} parent=1 // pred_check
      _
    $region15: #{tpu_custom_call.1} parent=1 // pred_check_branch
      %38 = sbr.rel (0) target = $region17
    $region16: #{tpu_custom_call.1} parent=1 // pred_region
      _
    $region17: #{tpu_custom_call.1} parent=1 // pred_fallthru
      _
    // Predicated region
    $region18: #{tpu_custom_call.1} parent=1 // pred_check
      _
    $region19: #{tpu_custom_call.1} parent=1 // pred_check_branch
      %40 = sbr.rel (0) target = $region21
    $region20: #{tpu_custom_call.1} parent=1 // pred_region
      %41 = dma.done [#allocation4], 128
    $region21: #{tpu_custom_call.1} parent=1 // pred_fallthru
      _
    // Predicated region
    $region22: #{tpu_custom_call.1} parent=1 // pred_check
      _
    $region23: #{tpu_custom_call.1} parent=1 // pred_check_branch
      %43 = sbr.rel (0) target = $region25
    $region24: #{tpu_custom_call.1} parent=1 // pred_region
      %44 = dma.done [#allocation7], 2048
    $region25: #{tpu_custom_call.1} parent=1 // pred_fallthru
      _
    %v45 = vld [vmem:[#allocation3] sm:$0xff]
    %v46 = vld [vmem:[#allocation6] sm:$0xff]
    %v47 = vld [vmem:[#allocation6 + $0x8] sm:$0xff]
    %v48 = vld [vmem:[#allocation6 + $0x10] sm:$0xff]
    %v49 = vld [vmem:[#allocation6 + $0x18] sm:$0xff]
    %v50 = vld [vmem:[#allocation6 + $0x20] sm:$0xff]
    %v51 = vld [vmem:[#allocation6 + $0x28] sm:$0xff]
    %v52 = vld [vmem:[#allocation6 + $0x30] sm:$0xff]
    %v53 = vld [vmem:[#allocation6 + $0x38] sm:$0xff]
    %v54 = vld [vmem:[#allocation6 + $0x40] sm:$0xff]
    %v55 = vld [vmem:[#allocation6 + $0x48] sm:$0xff]
    %v56 = vld [vmem:[#allocation6 + $0x50] sm:$0xff]
    %v57 = vld [vmem:[#allocation6 + $0x58] sm:$0xff]
    %v58 = vld [vmem:[#allocation6 + $0x60] sm:$0xff]
    %v59 = vld [vmem:[#allocation6 + $0x68] sm:$0xff]
    %v60 = vld [vmem:[#allocation6 + $0x70] sm:$0xff]
    %v61 = vld [vmem:[#allocation6 + $0x78] sm:$0xff]
    %v62 = vmul.f32 %v45, %v45
    %63 = vadd.xlane.f32.xlu0 %v62
    %v64 = vpop.xlane.xlu0 %63
    %v65 = vrsqrt.pop %v64
    %v66 = vmul.f32 %v64, %v65
    %vm67 = vcmp.eq.f32.partialorder %v64, inf
    %v68 = vsel %vm67, %v64, %v66
    %vm69 = vcmp.eq.f32.partialorder %v64, 0.0
    %v70 = vand.u32 %v64, 2147483648
    %v71 = vsel %vm69, %v70, %v68
    %v72 = vmax.f32 %v71, 1e-15
    %73 = vmatprep.subr.mxu0 0.0
    %74 = vmatpush1.msra.mxu0 %v46
    %75 = vmatprep.subr.mxu0 0.0
    %76 = vmatpush1.msra.mxu0 %v47
    %77 = vmatprep.subr.mxu0 0.0
    %78 = vmatpush1.msra.mxu0 %v48
    %79 = vmatprep.subr.mxu0 0.0
    %80 = vmatpush1.msra.mxu0 %v49
    %81 = vmatprep.subr.mxu0 0.0
    %82 = vmatpush1.msra.mxu0 %v50
    %83 = vmatprep.subr.mxu0 0.0
    %84 = vmatpush1.msra.mxu0 %v51
    %85 = vmatprep.subr.mxu0 0.0
    %86 = vmatpush1.msra.mxu0 %v52
    %87 = vmatprep.subr.mxu0 0.0
    %88 = vmatpush1.msra.mxu0 %v53
    %89 = vmatprep.subr.mxu0 0.0
    %90 = vmatpush1.msra.mxu0 %v54
    %91 = vmatprep.subr.mxu0 0.0
    %92 = vmatpush1.msra.mxu0 %v55
    %93 = vmatprep.subr.mxu0 0.0
    %94 = vmatpush1.msra.mxu0 %v56
    %95 = vmatprep.subr.mxu0 0.0
    %96 = vmatpush1.msra.mxu0 %v57
    %97 = vmatprep.subr.mxu0 0.0
    %98 = vmatpush1.msra.mxu0 %v58
    %99 = vmatprep.subr.mxu0 0.0
    %100 = vmatpush1.msra.mxu0 %v59
    %101 = vmatprep.subr.mxu0 0.0
    %102 = vmatpush1.msra.mxu0 %v60
    %103 = vmatprep.subr.mxu0 0.0
    %104 = vmatpush1.msra.mxu0 %v61
    %105 = vmatprep.subr.mxu0 0.0
    %106 = vmatpush1.msra.mxu0 0.0
    %107 = vmatprep.subr.mxu0 0.0
    %108 = vmatpush1.msra.mxu0 0.0
    %109 = vmatprep.subr.mxu0 0.0
    %110 = vmatpush1.msra.mxu0 0.0
    %111 = vmatprep.subr.mxu0 0.0
    %112 = vmatpush1.msra.mxu0 0.0
    %113 = vmatprep.subr.mxu0 0.0
    %114 = vmatpush1.msra.mxu0 0.0
    %115 = vmatprep.subr.mxu0 0.0
    %116 = vmatpush1.msra.mxu0 0.0
    %117 = vmatprep.subr.mxu0 0.0
    %118 = vmatpush1.msra.mxu0 0.0
    %119 = vmatprep.subr.mxu0 0.0
    %120 = vmatpush1.msra.mxu0 0.0
    %121 = vmatprep.subr.mxu0 0.0
    %122 = vmatpush1.msra.mxu0 0.0
    %123 = vmatprep.subr.mxu0 0.0
    %124 = vmatpush1.msra.mxu0 0.0
    %125 = vmatprep.subr.mxu0 0.0
    %126 = vmatpush1.msra.mxu0 0.0
    %127 = vmatprep.subr.mxu0 0.0
    %128 = vmatpush1.msra.mxu0 0.0
    %129 = vmatprep.subr.mxu0 0.0
    %130 = vmatpush1.msra.mxu0 0.0
    %131 = vmatprep.subr.mxu0 0.0
    %132 = vmatpush1.msra.mxu0 0.0
    %133 = vmatprep.subr.mxu0 0.0
    %134 = vmatpush1.msra.mxu0 0.0
    %135 = vmatprep.subr.mxu0 0.0
    %136 = vmatpush1.msra.mxu0 0.0
    %137 = vmatprep.mubr.f32.mxu0 0.0
    %138 = vmatmul.mubr.f32.gmra.mrb[0].mxu0 %v45
    %v139 = vpop.f32.mrb[0].mxu0
    %v140 = vadd.f32 0.0, %v139
    %v141 = vpop.f32.mrb[0].mxu0
    %142 = vdwg.mxu0
    %v143 = vmul.f32 %v140, %v140
    %144 = vadd.xlane.f32.xlu0 %v143
    %v145 = vpop.xlane.xlu0 %144
    %v146 = vrsqrt.pop %v145
    %v147 = vmul.f32 %v145, %v146
    %vm148 = vcmp.eq.f32.partialorder %v145, inf
    %v149 = vsel %vm148, %v145, %v147
    %vm150 = vcmp.eq.f32.partialorder %v145, 0.0
    %v151 = vand.u32 %v145, 2147483648
    %v152 = vsel %vm150, %v151, %v149
    %v153 = vmax.f32 %v152, 1e-15
    %v154 = vrcp.pop %v72
    %v155 = vrcp.pop %v153
    %v156 = vmul.f32 %v153, %v154
    %v157 = vmax.f32 %v72, -1.0
    %v158 = vmin.f32 %v157, 1.0
    %v159 = vadd.f32 %v158, 1.0
    %v160 = vlog2.pop %v159
    %v161 = vmul.f32 %v160, 0.6931472
    %v162 = vmul.f32 -0.5, %v158
    %v163 = vadd.f32 %v162, 1.0
    %v164 = vmul.f32 %v163, %v158
    %v165 = vand.u32 2147483647, %v158
    %vm166 = vcmp.lt.f32.partialorder %v165, 0.0004427343
    %v167 = vsel %vm166, %v164, %v161
    %v168 = vsub.f32 0.0, %v158
    %v169 = vadd.f32 %v168, 1.0
    %v170 = vlog2.pop %v169
    %v171 = vmul.f32 %v170, 0.6931472
    %v172 = vmul.f32 -0.5, %v168
    %v173 = vadd.f32 %v172, 1.0
    %v174 = vmul.f32 %v173, %v168
    %v175 = vand.u32 2147483647, %v168
    %vm176 = vcmp.lt.f32.partialorder %v175, 0.0004427343
    %v177 = vsel %vm176, %v174, %v171
    %v178 = vsub.f32 %v167, %v177
    %v179 = vmul.f32 %v178, 0.5
    %v180 = vmul.f32 %v156, %v179
    %v181 = vtanh.pop %v180
    %v182 = vmul.f32 %v181, %v155
    %vm183 = vcmp.eq.f32.partialorder %v145, 0.0
    %v184 = vsel %vm183, 0.0, %v182
    %v185 = vmul.f32 %v184, %v153
    %vm186 = vcmp.gt.f32.partialorder %v185, 0.996
    %v187 = vmax.f32 %v185, 1e-15
    %v188 = vrcp.pop %v187
    %v189 = vmul.f32 %v188, 0.996
    %v190 = vsel %vm186, %v189, 1.0
    %v191 = vmul.f32 %v184, %v190
    %v192 = vld [vmem:[%s2] sm:$0x1]
    %s193 = sld [smem:[#allocation2]]
    %v194 = vmul.f32 %v191, %v191
    %v195 = vmul.f32 %v194, %v145
    %v197 = vlaneseq
    %v198 = vshrl.u32 %v197, 7
    %v199 = vsub.s32 0, %v198
    %v200 = vrot.slane %v192, %v199
    %v202 = vmul.f32 %v140, %v200
    %203 = vadd.xlane.f32.xlu0 %v202
    %v204 = vpop.xlane.xlu0 %203
    %v205 = vmul.f32 %v191, %v204
    %v206 = vmul.f32 %v205, 2.0
    %v207 = vadd.f32 %v206, 1.0
    %v208 = vstv %s193
    %v209 = vmul.f32 %v208, %v195
    %v210 = vadd.f32 %v207, %v209
    %v211 = vmax.f32 %v210, 1e-15
    %v212 = vrcp.pop %v211
    %v213 = vadd.f32 %v207, %v208
    %v214 = vmul.f32 %v213, %v191
    %v215 = vmul.f32 %v214, %v212
    %v216 = vsub.f32 1.0, %v195
    %v217 = vmul.f32 %v216, %v212
    %v218 = vmul.f32 %v215, %v140
    %v219 = vmul.f32 %v217, %v200
    %v220 = vadd.f32 %v218, %v219
    %v221 = vmul.f32 %v220, %v220
    %222 = vadd.xlane.f32.xlu0 %v221
    %v223 = vpop.xlane.xlu0 %222
    %v224 = vrsqrt.pop %v223
    %v225 = vmul.f32 %v223, %v224
    %vm226 = vcmp.eq.f32.partialorder %v223, inf
    %v227 = vsel %vm226, %v223, %v225
    %vm228 = vcmp.eq.f32.partialorder %v223, 0.0
    %v229 = vand.u32 %v223, 2147483648
    %v230 = vsel %vm228, %v229, %v227
    %v231 = vmax.f32 %v230, 1e-15
    %vm232 = vcmp.gt.f32.partialorder %v231, 0.996
    %v233 = vrcp.pop %v231
    %v234 = vmul.f32 %v233, 0.996
    %v235 = vsel %vm232, %v234, 1.0
    %v236 = vmul.f32 %v235, %v220
    %237 = vst [vmem:[#allocation8] sm:$0xff] %v236
    // Predicated region
    $region26: #{tpu_custom_call.1} parent=1 // pred_check
      _
    $region27: #{tpu_custom_call.1} parent=1 // pred_check_branch
      %239 = sbr.rel (0) target = $region29
    $region28: #{tpu_custom_call.1} parent=1 // pred_region
      %s241 = ssub.s32 128, 128
      %242 = vsyncadd [#allocation5], %s241
      %s244 = sshll.u32 [#allocation8], 4
      %s245 = int_to_ptr.vmem [resolvable:$true] %s244
      %247 = dma.vmem_to_hbm [thread:$0]  %s245, 128, %s4, [#allocation5]
    $region29: #{tpu_custom_call.1} parent=1 // pred_fallthru
      _
    // Predicated region
    $region30: #{tpu_custom_call.1} parent=1 // pred_check
      _
    $region31: #{tpu_custom_call.1} parent=1 // pred_check_branch
      %249 = sbr.rel (0) target = $region33
    $region32: #{tpu_custom_call.1} parent=1 // pred_region
      %250 = dma.done [#allocation5], 128
    $region33: #{tpu_custom_call.1} parent=1 // pred_fallthru
      _
    %251 = vsyncpa [#allocation4], 1
    %252 = vsyncpa [#allocation7], 1
    %253 = vsyncpa [#allocation5], 1

</llo_original>
